<compile_context>
chip_gen: v7x
topology: tpu7x:2x2x1
jax: 0.10.0
libtpu: 0.0.40
codegen_flags: <defaults>
</compile_context>

<pallas_src>
import functools
from typing import NamedTuple

import jax
import jax.numpy as jnp
from jax import lax
from jax.experimental import pallas as pl
from jax.experimental.pallas import tpu as pltpu


LN_EPS = 1e-5  # PyTorch nn.LayerNorm default


def _round_up(a, b):
    return (a + b - 1) // b * b


# --------------------------------------------------------------------------- #
# Hardware queries (all guarded; conservative fallbacks)
# --------------------------------------------------------------------------- #
def _tpu_vmem_bytes():
    try:
        return int(pltpu.get_tpu_info().vmem_capacity_bytes)
    except Exception:
        return 64 * 1024 * 1024  # v7x per-TC VMEM (most conservative)


def _device_kind():
    try:
        return jax.devices()[0].device_kind.lower()
    except Exception:
        return ""


def _is_two_tensorcore_chip():
    return "v7" in _device_kind()


def _mxu_lane_multiple():
    kind = _device_kind()
    if any(v in kind for v in ("v2", "v3", "v4", "v5 lite", "v5lite", "v5e")):
        return 128  # 128x128 MXU
    return 256      # v6e / v7x: 256-wide MXU


def _pad_feature(dim, mxu_mult):
    # Lane-dense: at least a multiple of 128; round larger dims to the MXU granule.
    if dim <= 128:
        return 128
    return _round_up(dim, max(mxu_mult, 128))


# --------------------------------------------------------------------------- #
# Kernel
# --------------------------------------------------------------------------- #
def mlp_kernel(x_ref, w1_ref, b1_ref, gamma_ref, beta_ref, w2_ref, b2_ref, o_ref,
               *, hidden_real, ln_eps):
    # ----- Linear 1: [tm, in_p] @ [in_p, H_p] + b1 (MXU, f32 accumulation) -----
    h = jnp.dot(x_ref[...], w1_ref[...], preferred_element_type=jnp.float32)
    h = h + b1_ref[...].astype(jnp.float32)

    # ----- LayerNorm over the *real* hidden width -----
    # Padded columns of h are exactly 0 (zero W1 columns + zero b1 padding), so
    # sum(h) / sum(h*h) over the padded width equal the sums over the real width.
    inv_h = 1.0 / float(hidden_real)
    mean = jnp.sum(h, axis=-1, keepdims=True) * inv_h
    var = jnp.sum(h * h, axis=-1, keepdims=True) * inv_h - mean * mean
    var = jnp.maximum(var, 0.0)                      # guard f32 cancellation
    hn = (h - mean) * lax.rsqrt(var + ln_eps)        # rsqrt -> EUP slot
    # gamma/beta zero-padded -> padded hidden lanes become exactly 0 again.
    hn = hn * gamma_ref[...].astype(jnp.float32) + beta_ref[...].astype(jnp.float32)

    # ----- ReLU -----
    a = jnp.maximum(hn, 0.0)

    # ----- Linear 2: [tm, H_p] @ [H_p, out_p] + b2 -----
    out = jnp.dot(a.astype(w2_ref.dtype), w2_ref[...],
                  preferred_element_type=jnp.float32)
    out = out + b2_ref[...].astype(jnp.float32)
    o_ref[...] = out.astype(o_ref.dtype)


# --------------------------------------------------------------------------- #
# Parameter preparation (padding / casting hoisted OUT of the per-call hot path)
# --------------------------------------------------------------------------- #
class PreparedMLP(NamedTuple):
    w1: jax.Array      # [in_p, H_p]
    b1: jax.Array      # [1, H_p]
    gamma: jax.Array   # [1, H_p]
    beta: jax.Array    # [1, H_p]
    w2: jax.Array      # [H_p, out_p]
    b2: jax.Array      # [1, out_p]
    in_dim: int
    hidden_dim: int
    out_dim: int


def prepare_params(w1, b1, gamma, beta, w2, b2, *, mxu_dtype=None):
    """Pad feature dims once (lane-dense, MXU-width aware); optionally cast
    the matmul weights to a lower-precision MXU dtype (e.g. jnp.bfloat16)."""
    in_dim, hidden_dim = w1.shape
    out_dim = w2.shape[1]
    mult = _mxu_lane_multiple()
    in_p = _pad_feature(in_dim, mult)
    H_p = _pad_feature(hidden_dim, mult)
    out_p = _pad_feature(out_dim, mult)

    def pad2(a, rows, cols):
        if a.shape == (rows, cols):
            return a
        return jnp.pad(a, ((0, rows - a.shape[0]), (0, cols - a.shape[1])))

    w1_p = pad2(w1, in_p, H_p)
    w2_p = pad2(w2, H_p, out_p)
    b1_p = pad2(b1, 1, H_p)
    g_p = pad2(gamma, 1, H_p)     # zero-padded -> padded hidden lanes stay 0
    be_p = pad2(beta, 1, H_p)
    b2_p = pad2(b2, 1, out_p)

    if mxu_dtype is not None:
        w1_p = w1_p.astype(mxu_dtype)
        w2_p = w2_p.astype(mxu_dtype)

    return PreparedMLP(w1_p, b1_p, g_p, be_p, w2_p, b2_p,
                       in_dim, hidden_dim, out_dim)


# --------------------------------------------------------------------------- #
# Forward wrapper
# --------------------------------------------------------------------------- #
def _auto_row_tile(n_rows_p8, in_p, H_p, out_p, act_itemsize, weight_bytes,
                   vmem_limit):
    # Per-row working set: double-buffered x & out tiles + f32 intermediates.
    per_row = 2 * (in_p + out_p) * act_itemsize + 3 * H_p * 4
    avail = max(vmem_limit - weight_bytes, 512 * 1024)
    cap = max(8, min(1024, (avail // per_row) // 8 * 8))
    if _is_two_tensorcore_chip() and n_rows_p8 <= 2 * cap:
        # Guarantee >= 2 grid steps so both v7x TensorCores get work.
        return max(8, _round_up(pl.cdiv(n_rows_p8, 2), 8))
    return max(8, min(n_rows_p8, cap))


def mlp_forward(x, params: PreparedMLP, *, tm=None, ln_eps=LN_EPS,
                vmem_fraction=0.8):
    """x: [N, in_dim]; params: output of prepare_params()."""
    N, in_dim = x.shape
    assert in_dim == params.in_dim, "x feature dim must match prepared params"
    in_p, H_p = params.w1.shape
    out_p = params.w2.shape[1]
    hidden_real = params.hidden_dim
    out_dim = params.out_dim

    # Match the MXU operand dtype once (only when weights were cast to bf16).
    if params.w1.dtype == jnp.bfloat16 and x.dtype != jnp.bfloat16:
        x = x.astype(jnp.bfloat16)

    act_itemsize = jnp.dtype(x.dtype).itemsize
    w_itemsize = jnp.dtype(params.w1.dtype).itemsize
    b_itemsize = jnp.dtype(params.b1.dtype).itemsize

    vmem_limit = int(_tpu_vmem_bytes() * vmem_fraction)
    weight_bytes = ((in_p * H_p + H_p * out_p) * w_itemsize
                    + (3 * H_p + out_p) * b_itemsize)
    # TODO(synk): if weight_bytes > ~vmem_limit/2, switch to a K-tiled
    # (hidden-chunked) path with a VMEM f32 accumulator; not needed at these sizes.

    n_rows_p8 = _round_up(N, 8)
    if tm is None:
        tm = _auto_row_tile(n_rows_p8, in_p, H_p, out_p, act_itemsize,
                            weight_bytes, vmem_limit)
    tm = max(8, _round_up(tm, 8))
    tm = min(tm, n_rows_p8)
    N_p = _round_up(N, tm)

    # Only pad x when actually needed (hot-path traffic hygiene).
    if x.shape != (N_p, in_p):
        x = jnp.pad(x, ((0, N_p - N), (0, in_p - in_dim)))

    grid = (N_p // tm,)

    bytes_accessed = int(N_p * (in_p + out_p) * act_itemsize + weight_bytes)
    cost = pl.CostEstimate(
        flops=int(2 * N_p * (in_p * H_p + H_p * out_p)),
        transcendentals=int(N_p),           # one rsqrt per row
        bytes_accessed=bytes_accessed,
    )

    kernel = functools.partial(mlp_kernel, hidden_real=hidden_real, ln_eps=ln_eps)
    const_buf = pl.Buffered(1)  # constant index_map -> single-buffer residents

    out_padded = pl.pallas_call(
        kernel,
        out_shape=jax.ShapeDtypeStruct((N_p, out_p), x.dtype),
        grid_spec=pltpu.PrefetchScalarGridSpec(
            num_scalar_prefetch=0,
            grid=grid,
            in_specs=[
                pl.BlockSpec((tm, in_p), lambda i: (i, 0)),      # x tile (pipelined)
                pl.BlockSpec((in_p, H_p), lambda i: (0, 0),
                             pipeline_mode=const_buf),            # W1 (resident)
                pl.BlockSpec((1, H_p), lambda i: (0, 0),
                             pipeline_mode=const_buf),            # b1
                pl.BlockSpec((1, H_p), lambda i: (0, 0),
                             pipeline_mode=const_buf),            # LN gamma
                pl.BlockSpec((1, H_p), lambda i: (0, 0),
                             pipeline_mode=const_buf),            # LN beta
                pl.BlockSpec((H_p, out_p), lambda i: (0, 0),
                             pipeline_mode=const_buf),            # W2 (resident)
                pl.BlockSpec((1, out_p), lambda i: (0, 0),
                             pipeline_mode=const_buf),            # b2
            ],
            out_specs=pl.BlockSpec((tm, out_p), lambda i: (i, 0)),  # lane-dense out
        ),
        compiler_params=pltpu.CompilerParams(
            dimension_semantics=("parallel",),
            vmem_limit_bytes=vmem_limit,
        ),
        cost_estimate=cost,
    )(x, params.w1, params.b1, params.gamma, params.beta, params.w2, params.b2)

    return out_padded[:N, :out_dim]


# --------------------------------------------------------------------------- #
# Init + reference
# --------------------------------------------------------------------------- #
def init_params(key, in_dim, hidden_dim, out_dim, dtype=jnp.float32):
    """Deterministic synthetic init mirroring PyTorch nn.Linear's uniform bound."""
    k1, k2, k3, k4 = jax.random.split(key, 4)
    bound1 = 1.0 / jnp.sqrt(in_dim)
    bound2 = 1.0 / jnp.sqrt(hidden_dim)
    w1 = jax.random.uniform(k1, (in_dim, hidden_dim), dtype, -bound1, bound1)
    b1 = jax.random.uniform(k2, (1, hidden_dim), dtype, -bound1, bound1)
    gamma = jnp.ones((1, hidden_dim), dtype)   # nn.LayerNorm init
    beta = jnp.zeros((1, hidden_dim), dtype)
    w2 = jax.random.uniform(k3, (hidden_dim, out_dim), dtype, -bound2, bound2)
    b2 = jax.random.uniform(k4, (1, out_dim), dtype, -bound2, bound2)
    return w1, b1, gamma, beta, w2, b2


def mlp_reference(x, w1, b1, gamma, beta, w2, b2):
    h = x @ w1 + b1
    mean = jnp.mean(h, axis=-1, keepdims=True)
    var = jnp.mean((h - mean) ** 2, axis=-1, keepdims=True)
    hn = (h - mean) / jnp.sqrt(var + LN_EPS) * gamma + beta
    a = jnp.maximum(hn, 0.0)
    return a @ w2 + b2


if __name__ == "__main__":
    key = jax.random.PRNGKey(0)
    kx, kp = jax.random.split(key)

    # MLP(in_dim=16, out_dim=8, hidden_dim=32, num_layer=2, norm=True, act_fn='relu')
    N, in_dim, hidden_dim, out_dim = 16, 16, 32, 8
    x = jax.random.normal(kx, (N, in_dim), jnp.float32)
    raw_params = init_params(kp, in_dim, hidden_dim, out_dim)

    # Pad/cast params once (out of the per-call hot path); f32 here so the
    # result matches the exact reference. Pass mxu_dtype=jnp.bfloat16 for speed.
    prepared = prepare_params(*raw_params)

    out = mlp_forward(x, prepared)
    out = jax.block_until_ready(out)

    ref = mlp_reference(x, *raw_params)
    assert out.shape == (N, out_dim)
    assert jnp.allclose(out, ref, atol=1e-4, rtol=1e-4), "mismatch vs JAX reference"

    print("KERNEL_OK")
</pallas_src>

<mosaic_0001>
module attributes {stable_mosaic.version = 11 : i64} {
  func.func @mlp_kernel(%arg0: i32, %arg1: memref<16x128xf32, #tpu.memory_space<vmem>>, %arg2: memref<128x128xf32, #tpu.memory_space<vmem>>, %arg3: memref<1x128xf32, #tpu.memory_space<vmem>>, %arg4: memref<1x128xf32, #tpu.memory_space<vmem>>, %arg5: memref<1x128xf32, #tpu.memory_space<vmem>>, %arg6: memref<128x128xf32, #tpu.memory_space<vmem>>, %arg7: memref<1x128xf32, #tpu.memory_space<vmem>>, %arg8: memref<16x128xf32, #tpu.memory_space<vmem>>) attributes {dimension_semantics = [#tpu.dimension_semantics<parallel>], iteration_bounds = array<i64: 1>, scalar_prefetch = 0 : i64, scratch_operands = 0 : i64, tpu.core_type = #tpu.core_type<tc>, window_params = [{transform_indices = @transform_0, window_bounds = array<i64: 16, 128>}, {pipeline_mode = #tpu.pipeline_mode<synchronous>, transform_indices = @transform_1, window_bounds = array<i64: 128, 128>}, {pipeline_mode = #tpu.pipeline_mode<synchronous>, transform_indices = @transform_2, window_bounds = array<i64: 1, 128>}, {pipeline_mode = #tpu.pipeline_mode<synchronous>, transform_indices = @transform_3, window_bounds = array<i64: 1, 128>}, {pipeline_mode = #tpu.pipeline_mode<synchronous>, transform_indices = @transform_4, window_bounds = array<i64: 1, 128>}, {pipeline_mode = #tpu.pipeline_mode<synchronous>, transform_indices = @transform_5, window_bounds = array<i64: 128, 128>}, {pipeline_mode = #tpu.pipeline_mode<synchronous>, transform_indices = @transform_6, window_bounds = array<i64: 1, 128>}, {transform_indices = @transform_7, window_bounds = array<i64: 16, 128>}]} {
    %c0 = arith.constant 0 : index
    %c0_0 = arith.constant 0 : index
    %0 = vector.load %arg1[%c0, %c0_0] : memref<16x128xf32, #tpu.memory_space<vmem>>, vector<16x128xf32>
    %c0_1 = arith.constant 0 : index
    %c0_2 = arith.constant 0 : index
    %1 = vector.load %arg2[%c0_1, %c0_2] : memref<128x128xf32, #tpu.memory_space<vmem>>, vector<128x128xf32>
    %cst = arith.constant dense<0.000000e+00> : vector<16x128xf32>
    %2 = tpu.matmul %0, %1, %cst {dimension_numbers = #tpu.dot_dimension_numbers<[1], [0], [0], [1], [0, 0, 1, 1], [], []>} : vector<16x128xf32>, vector<128x128xf32>, vector<16x128xf32> -> vector<16x128xf32>
    %c0_3 = arith.constant 0 : index
    %c0_4 = arith.constant 0 : index
    %3 = vector.load %arg3[%c0_3, %c0_4] : memref<1x128xf32, #tpu.memory_space<vmem>>, vector<1x128xf32>
    %4 = vector.broadcast %3 : vector<1x128xf32> to vector<16x128xf32>
    %5 = arith.addf %2, %4 : vector<16x128xf32>
    %cst_5 = arith.constant dense<0.000000e+00> : vector<16xf32>
    %6 = vector.multi_reduction <add>, %5, %cst_5 [1] : vector<16x128xf32> to vector<16xf32>
    %7 = vector.shape_cast %6 : vector<16xf32> to vector<16x1xf32>
    %cst_6 = arith.constant 3.125000e-02 : f32
    %8 = vector.broadcast %cst_6 : f32 to vector<16x1xf32>
    %9 = arith.mulf %7, %8 : vector<16x1xf32>
    %10 = arith.mulf %5, %5 : vector<16x128xf32>
    %cst_7 = arith.constant dense<0.000000e+00> : vector<16xf32>
    %11 = vector.multi_reduction <add>, %10, %cst_7 [1] : vector<16x128xf32> to vector<16xf32>
    %12 = vector.shape_cast %11 : vector<16xf32> to vector<16x1xf32>
    %cst_8 = arith.constant 3.125000e-02 : f32
    %13 = vector.broadcast %cst_8 : f32 to vector<16x1xf32>
    %14 = arith.mulf %12, %13 : vector<16x1xf32>
    %15 = arith.mulf %9, %9 : vector<16x1xf32>
    %16 = arith.subf %14, %15 : vector<16x1xf32>
    %cst_9 = arith.constant 0.000000e+00 : f32
    %17 = vector.broadcast %cst_9 : f32 to vector<16x1xf32>
    %18 = arith.maximumf %16, %17 : vector<16x1xf32>
    %19 = vector.broadcast %9 : vector<16x1xf32> to vector<16x128xf32>
    %20 = arith.subf %5, %19 : vector<16x128xf32>
    %cst_10 = arith.constant 9.99999974E-6 : f32
    %21 = vector.broadcast %cst_10 : f32 to vector<16x1xf32>
    %22 = arith.addf %18, %21 : vector<16x1xf32>
    %23 = math.rsqrt %22 : vector<16x1xf32>
    %24 = vector.broadcast %23 : vector<16x1xf32> to vector<16x128xf32>
    %25 = arith.mulf %20, %24 : vector<16x128xf32>
    %c0_11 = arith.constant 0 : index
    %c0_12 = arith.constant 0 : index
    %26 = vector.load %arg4[%c0_11, %c0_12] : memref<1x128xf32, #tpu.memory_space<vmem>>, vector<1x128xf32>
    %27 = vector.broadcast %26 : vector<1x128xf32> to vector<16x128xf32>
    %28 = arith.mulf %25, %27 : vector<16x128xf32>
    %c0_13 = arith.constant 0 : index
    %c0_14 = arith.constant 0 : index
    %29 = vector.load %arg5[%c0_13, %c0_14] : memref<1x128xf32, #tpu.memory_space<vmem>>, vector<1x128xf32>
    %30 = vector.broadcast %29 : vector<1x128xf32> to vector<16x128xf32>
    %31 = arith.addf %28, %30 : vector<16x128xf32>
    %cst_15 = arith.constant 0.000000e+00 : f32
    %32 = vector.broadcast %cst_15 : f32 to vector<16x128xf32>
    %33 = arith.maximumf %31, %32 : vector<16x128xf32>
    %c0_16 = arith.constant 0 : index
    %c0_17 = arith.constant 0 : index
    %34 = vector.load %arg6[%c0_16, %c0_17] : memref<128x128xf32, #tpu.memory_space<vmem>>, vector<128x128xf32>
    %cst_18 = arith.constant dense<0.000000e+00> : vector<16x128xf32>
    %35 = tpu.matmul %33, %34, %cst_18 {dimension_numbers = #tpu.dot_dimension_numbers<[1], [0], [0], [1], [0, 0, 1, 1], [], []>} : vector<16x128xf32>, vector<128x128xf32>, vector<16x128xf32> -> vector<16x128xf32>
    %c0_19 = arith.constant 0 : index
    %c0_20 = arith.constant 0 : index
    %36 = vector.load %arg7[%c0_19, %c0_20] : memref<1x128xf32, #tpu.memory_space<vmem>>, vector<1x128xf32>
    %37 = vector.broadcast %36 : vector<1x128xf32> to vector<16x128xf32>
    %38 = arith.addf %35, %37 : vector<16x128xf32>
    %c0_21 = arith.constant 0 : index
    %c0_22 = arith.constant 0 : index
    %39 = vector.load %arg8[%c0_21, %c0_22] : memref<16x128xf32, #tpu.memory_space<vmem>>, vector<16x128xf32>
    tpu.vector_store %arg8[%c0_21, %c0_22], %38 {strides = array<i32>} : memref<16x128xf32, #tpu.memory_space<vmem>>, vector<16x128xf32>,
    return
  }
  func.func @transform_0(%arg0: i32) -> (i32, i32) {
    %c0_i32 = arith.constant 0 : i32
    %c0_i32_0 = arith.constant 0 : i32
    return %arg0, %c0_i32 : i32, i32
  }
  func.func @transform_1(%arg0: i32) -> (i32, i32) {
    %c0_i32 = arith.constant 0 : i32
    %c0_i32_0 = arith.constant 0 : i32
    %c0_i32_1 = arith.constant 0 : i32
    return %c0_i32, %c0_i32_0 : i32, i32
  }
  func.func @transform_2(%arg0: i32) -> (i32, i32) {
    %c0_i32 = arith.constant 0 : i32
    %c0_i32_0 = arith.constant 0 : i32
    %c0_i32_1 = arith.constant 0 : i32
    return %c0_i32, %c0_i32_0 : i32, i32
  }
  func.func @transform_3(%arg0: i32) -> (i32, i32) {
    %c0_i32 = arith.constant 0 : i32
    %c0_i32_0 = arith.constant 0 : i32
    %c0_i32_1 = arith.constant 0 : i32
    return %c0_i32, %c0_i32_0 : i32, i32
  }
  func.func @transform_4(%arg0: i32) -> (i32, i32) {
    %c0_i32 = arith.constant 0 : i32
    %c0_i32_0 = arith.constant 0 : i32
    %c0_i32_1 = arith.constant 0 : i32
    return %c0_i32, %c0_i32_0 : i32, i32
  }
  func.func @transform_5(%arg0: i32) -> (i32, i32) {
    %c0_i32 = arith.constant 0 : i32
    %c0_i32_0 = arith.constant 0 : i32
    %c0_i32_1 = arith.constant 0 : i32
    return %c0_i32, %c0_i32_0 : i32, i32
  }
  func.func @transform_6(%arg0: i32) -> (i32, i32) {
    %c0_i32 = arith.constant 0 : i32
    %c0_i32_0 = arith.constant 0 : i32
    %c0_i32_1 = arith.constant 0 : i32
    return %c0_i32, %c0_i32_0 : i32, i32
  }
  func.func @transform_7(%arg0: i32) -> (i32, i32) {
    %c0_i32 = arith.constant 0 : i32
    %c0_i32_0 = arith.constant 0 : i32
    return %arg0, %c0_i32 : i32, i32
  }
}

</mosaic_0001>

<llo_original>
// kernel: tpu_custom_call.1
$region0: #{tpu_custom_call.1}
  #allocation0 [shape = 'u32[]', space=smem, size = 0x4, offset = 0x4, fixed_abs, tag = 'smem constant byte address 0x4 - core index']
  #allocation1 [shape = 'u32[144,128]{1,0:T(1,128)}', space=vmem, size = 0x12000, scoped, tag = 'internal scratch']
  %s0 = inlined_call_operand.hbm [shape: f32[16,128], index: 0, kind: input, shape index: {}]
  %s1 = inlined_call_operand.hbm [shape: f32[128,128], index: 1, kind: input, shape index: {}]
  %s2 = inlined_call_operand.vmem [shape: f32[1,128], index: 2, kind: input, shape index: {}]
  %s3 = inlined_call_operand.vmem [shape: f32[1,128], index: 3, kind: input, shape index: {}]
  %s4 = inlined_call_operand.vmem [shape: f32[1,128], index: 4, kind: input, shape index: {}]
  %s5 = inlined_call_operand.hbm [shape: f32[128,128], index: 5, kind: input, shape index: {}]
  %s6 = inlined_call_operand.vmem [shape: f32[1,128], index: 6, kind: input, shape index: {}]
  %s7 = inlined_call_operand.hbm [shape: f32[16,128], index: 7, kind: output, shape index: {}]
  %s8 = sld [smem:[#allocation0]]
  $region50: #{tpu_custom_call.1} parent=0
    _
  %s10 = ssub.s32 1, %s8
  %s11 = scalar_select 0, %s10, %s8
  $region1: #{tpu_custom_call.1} parent=0
    #allocation2 [shape = 'u8[8192]{0}', space=vmem, size = 0x2000, scoped, tag = 'input window, operand 0, single buffered']
    #allocation3 [shape = 's32[1]{0}', space=sflag, size = 0x4, scoped, tag = 'scoped memory for tpu_custom_call.1']
    #allocation4 [shape = 's32[1]{0}', space=sflag, size = 0x4, scoped, tag = 'scoped memory for tpu_custom_call.1']
    #allocation5 [shape = 'u8[65536]{0}', space=vmem, size = 0x10000, scoped, tag = 'input window, operand 1, single buffered']
    #allocation6 [shape = 's32[1]{0}', space=sflag, size = 0x4, scoped, tag = 'scoped memory for tpu_custom_call.1']
    #allocation7 [shape = 'u8[65536]{0}', space=vmem, size = 0x10000, scoped, tag = 'input window, operand 5, single buffered']
    #allocation8 [shape = 'u8[8192]{0}', space=vmem, size = 0x2000, scoped, tag = 'output window, operand 0, single buffered']
    %12 = vsyncpa [#allocation3], 0
    %13 = vsyncpa [#allocation6], 0
    %14 = vsyncpa [#allocation4], 0
    // Predicated region
    $region2: #{tpu_custom_call.1} parent=1 // pred_check
      _
    $region3: #{tpu_custom_call.1} parent=1 // pred_check_branch
      %16 = sbr.rel (0) target = $region5
    $region4: #{tpu_custom_call.1} parent=1 // pred_region
      %s18 = ssub.s32 256, 256
      %19 = vsyncadd [#allocation3], %s18
      %s20 = sshll.u32 [#allocation2], 4
      %s21 = int_to_ptr.vmem [resolvable:$true] %s20
      %26 = dma.hbm_to_vmem [thread:$0]  %s0, 256, %s21, [#allocation3], 128, 128, 8
    $region5: #{tpu_custom_call.1} parent=1 // pred_fallthru
      _
    // Predicated region
    $region6: #{tpu_custom_call.1} parent=1 // pred_check
      _
    $region7: #{tpu_custom_call.1} parent=1 // pred_check_branch
      %28 = sbr.rel (0) target = $region9
    $region8: #{tpu_custom_call.1} parent=1 // pred_region
      %s30 = ssub.s32 2048, 2048
      %31 = vsyncadd [#allocation6], %s30
      %s32 = sshll.u32 [#allocation5], 4
      %s33 = int_to_ptr.vmem [resolvable:$true] %s32
      %38 = dma.hbm_to_vmem [thread:$0]  %s1, 2048, %s33, [#allocation6], 128, 128, 8
    $region9: #{tpu_custom_call.1} parent=1 // pred_fallthru
      _
    // Predicated region
    $region10: #{tpu_custom_call.1} parent=1 // pred_check
      _
    $region11: #{tpu_custom_call.1} parent=1 // pred_check_branch
      %40 = sbr.rel (0) target = $region13
    $region12: #{tpu_custom_call.1} parent=1 // pred_region
      _
    $region13: #{tpu_custom_call.1} parent=1 // pred_fallthru
      _
    // Predicated region
    $region14: #{tpu_custom_call.1} parent=1 // pred_check
      _
    $region15: #{tpu_custom_call.1} parent=1 // pred_check_branch
      %42 = sbr.rel (0) target = $region17
    $region16: #{tpu_custom_call.1} parent=1 // pred_region
      _
    $region17: #{tpu_custom_call.1} parent=1 // pred_fallthru
      _
    // Predicated region
    $region18: #{tpu_custom_call.1} parent=1 // pred_check
      _
    $region19: #{tpu_custom_call.1} parent=1 // pred_check_branch
      %44 = sbr.rel (0) target = $region21
    $region20: #{tpu_custom_call.1} parent=1 // pred_region
      _
    $region21: #{tpu_custom_call.1} parent=1 // pred_fallthru
      _
    // Predicated region
    $region22: #{tpu_custom_call.1} parent=1 // pred_check
      _
    $region23: #{tpu_custom_call.1} parent=1 // pred_check_branch
      %46 = sbr.rel (0) target = $region25
    $region24: #{tpu_custom_call.1} parent=1 // pred_region
      %s48 = ssub.s32 2048, 2048
      %49 = vsyncadd [#allocation6], %s48
      %s50 = sshll.u32 [#allocation7], 4
      %s51 = int_to_ptr.vmem [resolvable:$true] %s50
      %56 = dma.hbm_to_vmem [thread:$0]  %s5, 2048, %s51, [#allocation6], 128, 128, 8
    $region25: #{tpu_custom_call.1} parent=1 // pred_fallthru
      _
    // Predicated region
    $region26: #{tpu_custom_call.1} parent=1 // pred_check
      _
    $region27: #{tpu_custom_call.1} parent=1 // pred_check_branch
      %58 = sbr.rel (0) target = $region29
    $region28: #{tpu_custom_call.1} parent=1 // pred_region
      _
    $region29: #{tpu_custom_call.1} parent=1 // pred_fallthru
      _
    // Predicated region
    $region30: #{tpu_custom_call.1} parent=1 // pred_check
      _
    $region31: #{tpu_custom_call.1} parent=1 // pred_check_branch
      %60 = sbr.rel (0) target = $region33
    $region32: #{tpu_custom_call.1} parent=1 // pred_region
      %61 = dma.done [#allocation3], 256
    $region33: #{tpu_custom_call.1} parent=1 // pred_fallthru
      _
    // Predicated region
    $region34: #{tpu_custom_call.1} parent=1 // pred_check
      _
    $region35: #{tpu_custom_call.1} parent=1 // pred_check_branch
      %63 = sbr.rel (0) target = $region37
    $region36: #{tpu_custom_call.1} parent=1 // pred_region
      %64 = dma.done [#allocation6], 2048
    $region37: #{tpu_custom_call.1} parent=1 // pred_fallthru
      _
    // Predicated region
    $region38: #{tpu_custom_call.1} parent=1 // pred_check
      _
    $region39: #{tpu_custom_call.1} parent=1 // pred_check_branch
      %66 = sbr.rel (0) target = $region41
    $region40: #{tpu_custom_call.1} parent=1 // pred_region
      %67 = dma.done [#allocation6], 2048
    $region41: #{tpu_custom_call.1} parent=1 // pred_fallthru
      _
    %v68 = vld [vmem:[#allocation2] sm:$0xff]
    %v69 = vld [vmem:[#allocation2 + $0x8] sm:$0xff]
    %v70 = vld [vmem:[#allocation5] sm:$0xff]
    %v71 = vld [vmem:[#allocation5 + $0x8] sm:$0xff]
    %v72 = vld [vmem:[#allocation5 + $0x10] sm:$0xff]
    %v73 = vld [vmem:[#allocation5 + $0x18] sm:$0xff]
    %v74 = vld [vmem:[#allocation5 + $0x20] sm:$0xff]
    %v75 = vld [vmem:[#allocation5 + $0x28] sm:$0xff]
    %v76 = vld [vmem:[#allocation5 + $0x30] sm:$0xff]
    %v77 = vld [vmem:[#allocation5 + $0x38] sm:$0xff]
    %v78 = vld [vmem:[#allocation5 + $0x40] sm:$0xff]
    %v79 = vld [vmem:[#allocation5 + $0x48] sm:$0xff]
    %v80 = vld [vmem:[#allocation5 + $0x50] sm:$0xff]
    %v81 = vld [vmem:[#allocation5 + $0x58] sm:$0xff]
    %v82 = vld [vmem:[#allocation5 + $0x60] sm:$0xff]
    %v83 = vld [vmem:[#allocation5 + $0x68] sm:$0xff]
    %v84 = vld [vmem:[#allocation5 + $0x70] sm:$0xff]
    %v85 = vld [vmem:[#allocation5 + $0x78] sm:$0xff]
    %v86 = vld [vmem:[%s2] sm:$0x1]
    %v88 = vlaneseq
    %v89 = vshrl.u32 %v88, 7
    %v90 = vsub.s32 0, %v89
    %v91 = vrot.slane %v86, %v90
    %93 = vmatprep.subr.mxu0 0.0
    %94 = vmatpush1.msra.mxu0 %v70
    %95 = vmatprep.subr.mxu0 0.0
    %96 = vmatpush1.msra.mxu0 %v71
    %97 = vmatprep.subr.mxu0 0.0
    %98 = vmatpush1.msra.mxu0 %v72
    %99 = vmatprep.subr.mxu0 0.0
    %100 = vmatpush1.msra.mxu0 %v73
    %101 = vmatprep.subr.mxu0 0.0
    %102 = vmatpush1.msra.mxu0 %v74
    %103 = vmatprep.subr.mxu0 0.0
    %104 = vmatpush1.msra.mxu0 %v75
    %105 = vmatprep.subr.mxu0 0.0
    %106 = vmatpush1.msra.mxu0 %v76
    %107 = vmatprep.subr.mxu0 0.0
    %108 = vmatpush1.msra.mxu0 %v77
    %109 = vmatprep.subr.mxu0 0.0
    %110 = vmatpush1.msra.mxu0 %v78
    %111 = vmatprep.subr.mxu0 0.0
    %112 = vmatpush1.msra.mxu0 %v79
    %113 = vmatprep.subr.mxu0 0.0
    %114 = vmatpush1.msra.mxu0 %v80
    %115 = vmatprep.subr.mxu0 0.0
    %116 = vmatpush1.msra.mxu0 %v81
    %117 = vmatprep.subr.mxu0 0.0
    %118 = vmatpush1.msra.mxu0 %v82
    %119 = vmatprep.subr.mxu0 0.0
    %120 = vmatpush1.msra.mxu0 %v83
    %121 = vmatprep.subr.mxu0 0.0
    %122 = vmatpush1.msra.mxu0 %v84
    %123 = vmatprep.subr.mxu0 0.0
    %124 = vmatpush1.msra.mxu0 %v85
    %125 = vmatprep.subr.mxu0 0.0
    %126 = vmatpush1.msra.mxu0 0.0
    %127 = vmatprep.subr.mxu0 0.0
    %128 = vmatpush1.msra.mxu0 0.0
    %129 = vmatprep.subr.mxu0 0.0
    %130 = vmatpush1.msra.mxu0 0.0
    %131 = vmatprep.subr.mxu0 0.0
    %132 = vmatpush1.msra.mxu0 0.0
    %133 = vmatprep.subr.mxu0 0.0
    %134 = vmatpush1.msra.mxu0 0.0
    %135 = vmatprep.subr.mxu0 0.0
    %136 = vmatpush1.msra.mxu0 0.0
    %137 = vmatprep.subr.mxu0 0.0
    %138 = vmatpush1.msra.mxu0 0.0
    %139 = vmatprep.subr.mxu0 0.0
    %140 = vmatpush1.msra.mxu0 0.0
    %141 = vmatprep.subr.mxu0 0.0
    %142 = vmatpush1.msra.mxu0 0.0
    %143 = vmatprep.subr.mxu0 0.0
    %144 = vmatpush1.msra.mxu0 0.0
    %145 = vmatprep.subr.mxu0 0.0
    %146 = vmatpush1.msra.mxu0 0.0
    %147 = vmatprep.subr.mxu0 0.0
    %148 = vmatpush1.msra.mxu0 0.0
    %149 = vmatprep.subr.mxu0 0.0
    %150 = vmatpush1.msra.mxu0 0.0
    %151 = vmatprep.subr.mxu0 0.0
    %152 = vmatpush1.msra.mxu0 0.0
    %153 = vmatprep.subr.mxu0 0.0
    %154 = vmatpush1.msra.mxu0 0.0
    %155 = vmatprep.subr.mxu0 0.0
    %156 = vmatpush1.msra.mxu0 0.0
    %157 = vmatprep.mubr.f32.mxu0 0.0
    %158 = vmatmul.mubr.f32.gmra.mrb[0].mxu0 %v68
    %v159 = vpop.f32.mrb[0].mxu0
    %v160 = vadd.f32 %v91, %v159
    %v161 = vpop.f32.mrb[0].mxu0
    %162 = vmatprep.mubr.f32.mxu0 0.0
    %163 = vmatmul.mubr.f32.gmra.mrb[0].mxu0 %v69
    %v164 = vpop.f32.mrb[0].mxu0
    %v165 = vadd.f32 %v91, %v164
    %v166 = vpop.f32.mrb[0].mxu0
    %167 = vdwg.mxu0
    %168 = vadd.xlane.f32.xlu0 %v160
    %v169 = vpop.xlane.xlu0 %168
    %170 = vadd.xlane.f32.xlu0 %v165
    %v171 = vpop.xlane.xlu0 %170
    %v172 = vmul.f32 %v169, 0.03125
    %v173 = vmul.f32 %v171, 0.03125
    %v174 = vmul.f32 %v160, %v160
    %v175 = vmul.f32 %v165, %v165
    %176 = vadd.xlane.f32.xlu0 %v174
    %v177 = vpop.xlane.xlu0 %176
    %178 = vadd.xlane.f32.xlu0 %v175
    %v179 = vpop.xlane.xlu0 %178
    %v180 = vmul.f32 %v177, 0.03125
    %v181 = vmul.f32 %v179, 0.03125
    %v182 = vmul.f32 %v172, %v172
    %v183 = vmul.f32 %v173, %v173
    %v184 = vsub.f32 %v180, %v182
    %v185 = vsub.f32 %v181, %v183
    %v186 = vmax.f32 %v184, 0.0
    %v187 = vmax.f32 %v185, 0.0
    %v188 = vsub.f32 %v160, %v172
    %v189 = vsub.f32 %v165, %v173
    %v190 = vadd.f32 %v186, 1e-05
    %v191 = vadd.f32 %v187, 1e-05
    %v192 = vrsqrt.pop %v190
    %v193 = vrsqrt.pop %v191
    %v194 = vmul.f32 %v188, %v192
    %v195 = vmul.f32 %v189, %v193
    %v196 = vld [vmem:[%s3] sm:$0x1]
    %v198 = vlaneseq
    %v199 = vshrl.u32 %v198, 7
    %v200 = vsub.s32 0, %v199
    %v201 = vrot.slane %v196, %v200
    %v203 = vmul.f32 %v194, %v201
    %v204 = vmul.f32 %v195, %v201
    %v205 = vld [vmem:[%s4] sm:$0x1]
    %v207 = vlaneseq
    %v208 = vshrl.u32 %v207, 7
    %v209 = vsub.s32 0, %v208
    %v210 = vrot.slane %v205, %v209
    %v212 = vadd.f32 %v203, %v210
    %v213 = vadd.f32 %v204, %v210
    %v214 = vmax.f32 %v212, 0.0
    %v215 = vmax.f32 %v213, 0.0
    %v216 = vld [vmem:[#allocation7] sm:$0xff]
    %v217 = vld [vmem:[#allocation7 + $0x8] sm:$0xff]
    %v218 = vld [vmem:[#allocation7 + $0x10] sm:$0xff]
    %v219 = vld [vmem:[#allocation7 + $0x18] sm:$0xff]
    %v220 = vld [vmem:[#allocation7 + $0x20] sm:$0xff]
    %v221 = vld [vmem:[#allocation7 + $0x28] sm:$0xff]
    %v222 = vld [vmem:[#allocation7 + $0x30] sm:$0xff]
    %v223 = vld [vmem:[#allocation7 + $0x38] sm:$0xff]
    %v224 = vld [vmem:[#allocation7 + $0x40] sm:$0xff]
    %v225 = vld [vmem:[#allocation7 + $0x48] sm:$0xff]
    %v226 = vld [vmem:[#allocation7 + $0x50] sm:$0xff]
    %v227 = vld [vmem:[#allocation7 + $0x58] sm:$0xff]
    %v228 = vld [vmem:[#allocation7 + $0x60] sm:$0xff]
    %v229 = vld [vmem:[#allocation7 + $0x68] sm:$0xff]
    %v230 = vld [vmem:[#allocation7 + $0x70] sm:$0xff]
    %v231 = vld [vmem:[#allocation7 + $0x78] sm:$0xff]
    %v232 = vld [vmem:[%s6] sm:$0x1]
    %v234 = vlaneseq
    %v235 = vshrl.u32 %v234, 7
    %v236 = vsub.s32 0, %v235
    %v237 = vrot.slane %v232, %v236
    %239 = vmatprep.subr.mxu0 0.0
    %240 = vmatpush1.msra.mxu0 %v216
    %241 = vmatprep.subr.mxu0 0.0
    %242 = vmatpush1.msra.mxu0 %v217
    %243 = vmatprep.subr.mxu0 0.0
    %244 = vmatpush1.msra.mxu0 %v218
    %245 = vmatprep.subr.mxu0 0.0
    %246 = vmatpush1.msra.mxu0 %v219
    %247 = vmatprep.subr.mxu0 0.0
    %248 = vmatpush1.msra.mxu0 %v220
    %249 = vmatprep.subr.mxu0 0.0
    %250 = vmatpush1.msra.mxu0 %v221
    %251 = vmatprep.subr.mxu0 0.0
    %252 = vmatpush1.msra.mxu0 %v222
    %253 = vmatprep.subr.mxu0 0.0
    %254 = vmatpush1.msra.mxu0 %v223
    %255 = vmatprep.subr.mxu0 0.0
    %256 = vmatpush1.msra.mxu0 %v224
    %257 = vmatprep.subr.mxu0 0.0
    %258 = vmatpush1.msra.mxu0 %v225
    %259 = vmatprep.subr.mxu0 0.0
    %260 = vmatpush1.msra.mxu0 %v226
    %261 = vmatprep.subr.mxu0 0.0
    %262 = vmatpush1.msra.mxu0 %v227
    %263 = vmatprep.subr.mxu0 0.0
    %264 = vmatpush1.msra.mxu0 %v228
    %265 = vmatprep.subr.mxu0 0.0
    %266 = vmatpush1.msra.mxu0 %v229
    %267 = vmatprep.subr.mxu0 0.0
    %268 = vmatpush1.msra.mxu0 %v230
    %269 = vmatprep.subr.mxu0 0.0
    %270 = vmatpush1.msra.mxu0 %v231
    %271 = vmatprep.subr.mxu0 0.0
    %272 = vmatpush1.msra.mxu0 0.0
    %273 = vmatprep.subr.mxu0 0.0
    %274 = vmatpush1.msra.mxu0 0.0
    %275 = vmatprep.subr.mxu0 0.0
    %276 = vmatpush1.msra.mxu0 0.0
    %277 = vmatprep.subr.mxu0 0.0
    %278 = vmatpush1.msra.mxu0 0.0
    %279 = vmatprep.subr.mxu0 0.0
    %280 = vmatpush1.msra.mxu0 0.0
    %281 = vmatprep.subr.mxu0 0.0
    %282 = vmatpush1.msra.mxu0 0.0
    %283 = vmatprep.subr.mxu0 0.0
    %284 = vmatpush1.msra.mxu0 0.0
    %285 = vmatprep.subr.mxu0 0.0
    %286 = vmatpush1.msra.mxu0 0.0
    %287 = vmatprep.subr.mxu0 0.0
    %288 = vmatpush1.msra.mxu0 0.0
    %289 = vmatprep.subr.mxu0 0.0
    %290 = vmatpush1.msra.mxu0 0.0
    %291 = vmatprep.subr.mxu0 0.0
    %292 = vmatpush1.msra.mxu0 0.0
    %293 = vmatprep.subr.mxu0 0.0
    %294 = vmatpush1.msra.mxu0 0.0
    %295 = vmatprep.subr.mxu0 0.0
    %296 = vmatpush1.msra.mxu0 0.0
    %297 = vmatprep.subr.mxu0 0.0
    %298 = vmatpush1.msra.mxu0 0.0
    %299 = vmatprep.subr.mxu0 0.0
    %300 = vmatpush1.msra.mxu0 0.0
    %301 = vmatprep.subr.mxu0 0.0
    %302 = vmatpush1.msra.mxu0 0.0
    %303 = vmatprep.mubr.f32.mxu0 0.0
    %304 = vmatmul.mubr.f32.gmra.mrb[0].mxu0 %v214
    %v305 = vpop.f32.mrb[0].mxu0
    %v306 = vadd.f32 %v237, %v305
    %v307 = vpop.f32.mrb[0].mxu0
    %308 = vmatprep.mubr.f32.mxu0 0.0
    %309 = vmatmul.mubr.f32.gmra.mrb[0].mxu0 %v215
    %v310 = vpop.f32.mrb[0].mxu0
    %v311 = vadd.f32 %v237, %v310
    %v312 = vpop.f32.mrb[0].mxu0
    %313 = vdwg.mxu0
    %314 = vst [vmem:[#allocation8] sm:$0xff] %v306
    %315 = vst [vmem:[#allocation8 + $0x8] sm:$0xff] %v311
    // Predicated region
    $region42: #{tpu_custom_call.1} parent=1 // pred_check
      _
    $region43: #{tpu_custom_call.1} parent=1 // pred_check_branch
      %317 = sbr.rel (0) target = $region45
    $region44: #{tpu_custom_call.1} parent=1 // pred_region
      %s319 = ssub.s32 256, 256
      %320 = vsyncadd [#allocation4], %s319
      %s321 = sshll.u32 [#allocation8], 4
      %s322 = int_to_ptr.vmem [resolvable:$true] %s321
      %327 = dma.vmem_to_hbm [thread:$0]  %s322, 256, %s7, [#allocation4], 128, 128, 8
    $region45: #{tpu_custom_call.1} parent=1 // pred_fallthru
      _
    // Predicated region
    $region46: #{tpu_custom_call.1} parent=1 // pred_check
      _
    $region47: #{tpu_custom_call.1} parent=1 // pred_check_branch
      %329 = sbr.rel (0) target = $region49
    $region48: #{tpu_custom_call.1} parent=1 // pred_region
      %330 = dma.done [#allocation4], 256
    $region49: #{tpu_custom_call.1} parent=1 // pred_fallthru
      _
    %331 = vsyncpa [#allocation3], 1
    %332 = vsyncpa [#allocation6], 1
    %333 = vsyncpa [#allocation4], 1

</llo_original>
